<compile_context>
chip_gen: v6e
topology: v6e:2x2x1
jax: 0.10.0
libtpu: 0.0.40
codegen_flags: <defaults>
</compile_context>

<pallas_src>
import functools

import jax
import jax.numpy as jnp
from jax.experimental import pallas as pl
from jax.experimental.pallas import tpu as pltpu


def _neighbor_vector_kernel(x_ref, w_ref, b_ref, *rest, threshold, scale):
    """fc -> ReLU -> (optional) dropout on one (block_b, block_n) output tile.

    `rest` is (o_ref,) in eval mode and (bits_ref, o_ref) in training mode;
    `threshold` is a static Python int (uint32 drop threshold) or None.
    """
    if threshold is None:
        (o_ref,) = rest
        bits_ref = None
    else:
        bits_ref, o_ref = rest

    # MXU matmul with f32 accumulation (operands may be bf16).
    y = jnp.dot(x_ref[...], w_ref[...], preferred_element_type=jnp.float32)
    # Bias (1, block_n) broadcasts over rows; ReLU.
    y = jnp.maximum(y + b_ref[...], 0.0)

    if threshold is not None:
        # Integer-threshold dropout: drop where bits < threshold, otherwise
        # scale survivors by 1/(1-p).  One compare-select + one mul per element.
        y = jnp.where(bits_ref[...] < jnp.uint32(threshold), 0.0, y * scale)

    o_ref[...] = y.astype(o_ref.dtype)


def neighbor_vector(
    neighbor_reps,
    weight,
    bias,
    *,
    dropout_p=0.0,
    rng_key=None,
    block_b=None,
    block_n=None,
    matmul_dtype=jnp.bfloat16,
):
    """Forward pass of NeighborVector.

    neighbor_reps: [B, in_dim] f32
    weight:        [in_dim, hidden]   (transpose of nn.Linear's [hidden, in_dim])
    bias:          [hidden] or [1, hidden]
    dropout_p:     static Python float; 0.0 == eval mode (identity dropout)
    rng_key:       jax PRNG key, required when dropout_p > 0
    """
    B, in_dim = neighbor_reps.shape
    in_dim_w, hidden = weight.shape
    assert in_dim == in_dim_w
    bias = jnp.reshape(bias, (1, hidden)).astype(jnp.float32)

    # --- tiling --------------------------------------------------------------
    if block_b is None:
        block_b = B if B <= 512 else 512
    if block_n is None:
        block_n = hidden if hidden <= 512 else 512
    assert B % block_b == 0, "batch must be divisible by block_b"
    assert hidden % block_n == 0, "hidden must be divisible by block_n"
    grid = (B // block_b, hidden // block_n)

    # --- operand dtypes ------------------------------------------------------
    if matmul_dtype is not None:
        x_mm = neighbor_reps.astype(matmul_dtype)
        w_mm = weight.astype(matmul_dtype)
    else:
        x_mm = neighbor_reps
        w_mm = weight

    training = float(dropout_p) > 0.0
    if training:
        assert rng_key is not None, "rng_key required when dropout_p > 0"
        threshold = min(int(round(float(dropout_p) * (2 ** 32))), 2 ** 32 - 1)
        scale = 1.0 / (1.0 - float(dropout_p))
        bits = jax.random.bits(rng_key, (B, hidden), dtype=jnp.uint32)
    else:
        threshold = None
        scale = 1.0
        bits = None

    kernel = functools.partial(
        _neighbor_vector_kernel, threshold=threshold, scale=scale
    )

    # --- specs ---------------------------------------------------------------
    in_specs = [
        pl.BlockSpec((block_b, in_dim), lambda i, j: (i, 0)),   # x tile
        pl.BlockSpec((in_dim, block_n), lambda i, j: (0, j)),   # W column tile
        pl.BlockSpec((1, block_n), lambda i, j: (0, j)),        # bias tile
    ]
    inputs = [x_mm, w_mm, bias]
    if training:
        in_specs.append(pl.BlockSpec((block_b, block_n), lambda i, j: (i, j)))
        inputs.append(bits)
    out_spec = pl.BlockSpec((block_b, block_n), lambda i, j: (i, j))

    # --- VMEM budget (double-buffered tiles) + cost estimate ------------------
    mm_bytes = jnp.dtype(x_mm.dtype).itemsize
    tile_bytes = (
        block_b * in_dim * mm_bytes          # x tile
        + in_dim * block_n * mm_bytes        # W tile
        + block_n * 4                        # bias tile
        + block_b * block_n * 4              # out tile
        + (block_b * block_n * 4 if training else 0)  # bits tile
    )
    vmem_limit = min(max(2 * tile_bytes + (8 << 20), 16 << 20), 100 << 20)

    bytes_accessed = (
        B * in_dim * mm_bytes
        + in_dim * hidden * mm_bytes
        + hidden * 4
        + B * hidden * 4
        + (B * hidden * 4 if training else 0)
    )
    cost = pl.CostEstimate(
        flops=2 * B * in_dim * hidden,
        transcendentals=0,
        bytes_accessed=bytes_accessed,
    )

    return pl.pallas_call(
        kernel,
        out_shape=jax.ShapeDtypeStruct((B, hidden), jnp.float32),
        grid_spec=pltpu.PrefetchScalarGridSpec(
            num_scalar_prefetch=0,
            grid=grid,
            in_specs=in_specs,
            out_specs=out_spec,
        ),
        compiler_params=pltpu.CompilerParams(
            dimension_semantics=("parallel", "parallel"),
            vmem_limit_bytes=vmem_limit,
        ),
        cost_estimate=cost,
    )(*inputs)


if __name__ == "__main__":
    # Small shapes consistent with the module: fc: in_dim -> hidden_dim.
    B, IN_DIM, HIDDEN = 16, 64, 128
    DROPOUT_P = 0.5

    key = jax.random.PRNGKey(0)
    kx, kw, kb, kd = jax.random.split(key, 4)

    neighbor_reps = jax.random.normal(kx, (B, IN_DIM), dtype=jnp.float32)
    weight = jax.random.normal(kw, (IN_DIM, HIDDEN), dtype=jnp.float32) * 0.05
    bias = jax.random.normal(kb, (HIDDEN,), dtype=jnp.float32) * 0.05

    # --- eval mode (dropout disabled) vs pure-JAX reference -------------------
    out_eval = neighbor_vector(neighbor_reps, weight, bias, dropout_p=0.0)
    out_eval = jax.block_until_ready(out_eval)
    ref_eval = jnp.maximum(neighbor_reps @ weight + bias[None, :], 0.0)
    # bf16 matmul operands -> loose-ish tolerance against the f32 reference.
    assert jnp.allclose(out_eval, ref_eval, atol=2e-2, rtol=2e-2), "eval mismatch"

    # --- training mode (dropout active) ---------------------------------------
    out_train = neighbor_vector(
        neighbor_reps, weight, bias, dropout_p=DROPOUT_P, rng_key=kd
    )
    out_train = jax.block_until_ready(out_train)
    assert out_train.shape == (B, HIDDEN)
    assert bool(jnp.all(out_train >= 0.0))
    # Surviving elements must equal the eval output scaled by 1/(1-p).
    nz = out_train != 0.0
    assert jnp.allclose(
        jnp.where(nz, out_train, 0.0),
        jnp.where(nz, ref_eval / (1.0 - DROPOUT_P), 0.0),
        atol=4e-2,
        rtol=4e-2,
    ), "train mismatch"

    print("KERNEL_OK")
</pallas_src>

<mosaic_0001>
module attributes {stable_mosaic.version = 11 : i64} {
  func.func @_neighbor_vector_kernel(%arg0: i32, %arg1: i32, %arg2: memref<16x64xbf16, #tpu.memory_space<vmem>>, %arg3: memref<64x128xbf16, #tpu.memory_space<vmem>>, %arg4: memref<1x128xf32, #tpu.memory_space<vmem>>, %arg5: memref<16x128xf32, #tpu.memory_space<vmem>>) attributes {dimension_semantics = [#tpu.dimension_semantics<parallel>, #tpu.dimension_semantics<parallel>], iteration_bounds = array<i64: 1, 1>, scalar_prefetch = 0 : i64, scratch_operands = 0 : i64, tpu.core_type = #tpu.core_type<tc>, window_params = [{transform_indices = @transform_0, window_bounds = array<i64: 16, 64>}, {transform_indices = @transform_1, window_bounds = array<i64: 64, 128>}, {transform_indices = @transform_2, window_bounds = array<i64: 1, 128>}, {transform_indices = @transform_3, window_bounds = array<i64: 16, 128>}]} {
    %c0 = arith.constant 0 : index
    %c0_0 = arith.constant 0 : index
    %0 = vector.load %arg2[%c0, %c0_0] : memref<16x64xbf16, #tpu.memory_space<vmem>>, vector<16x64xbf16>
    %c0_1 = arith.constant 0 : index
    %c0_2 = arith.constant 0 : index
    %1 = vector.load %arg3[%c0_1, %c0_2] : memref<64x128xbf16, #tpu.memory_space<vmem>>, vector<64x128xbf16>
    %cst = arith.constant dense<0.000000e+00> : vector<16x128xf32>
    %2 = tpu.matmul %0, %1, %cst {dimension_numbers = #tpu.dot_dimension_numbers<[1], [0], [0], [1], [0, 0, 1, 1], [], []>} : vector<16x64xbf16>, vector<64x128xbf16>, vector<16x128xf32> -> vector<16x128xf32>
    %c0_3 = arith.constant 0 : index
    %c0_4 = arith.constant 0 : index
    %3 = vector.load %arg4[%c0_3, %c0_4] : memref<1x128xf32, #tpu.memory_space<vmem>>, vector<1x128xf32>
    %4 = vector.broadcast %3 : vector<1x128xf32> to vector<16x128xf32>
    %5 = arith.addf %2, %4 : vector<16x128xf32>
    %cst_5 = arith.constant 0.000000e+00 : f32
    %6 = vector.broadcast %cst_5 : f32 to vector<16x128xf32>
    %7 = arith.maximumf %5, %6 : vector<16x128xf32>
    %c0_6 = arith.constant 0 : index
    %c0_7 = arith.constant 0 : index
    %8 = vector.load %arg5[%c0_6, %c0_7] : memref<16x128xf32, #tpu.memory_space<vmem>>, vector<16x128xf32>
    tpu.vector_store %arg5[%c0_6, %c0_7], %7 {strides = array<i32>} : memref<16x128xf32, #tpu.memory_space<vmem>>, vector<16x128xf32>,
    return
  }
  func.func @transform_0(%arg0: i32, %arg1: i32) -> (i32, i32) {
    %c0_i32 = arith.constant 0 : i32
    %c0_i32_0 = arith.constant 0 : i32
    return %arg0, %c0_i32 : i32, i32
  }
  func.func @transform_1(%arg0: i32, %arg1: i32) -> (i32, i32) {
    %c0_i32 = arith.constant 0 : i32
    %c0_i32_0 = arith.constant 0 : i32
    return %c0_i32, %arg1 : i32, i32
  }
  func.func @transform_2(%arg0: i32, %arg1: i32) -> (i32, i32) {
    %c0_i32 = arith.constant 0 : i32
    %c0_i32_0 = arith.constant 0 : i32
    return %c0_i32, %arg1 : i32, i32
  }
  func.func @transform_3(%arg0: i32, %arg1: i32) -> (i32, i32) {
    %c0_i32 = arith.constant 0 : i32
    return %arg0, %arg1 : i32, i32
  }
}

</mosaic_0001>

<llo_original>
// kernel: tpu_custom_call.1
$region0: #{tpu_custom_call.1}
  #allocation0 [shape = 'u32[]', space=smem, size = 0x4, offset = 0x4, fixed_abs, tag = 'smem constant byte address 0x4 - core index']
  #allocation1 [shape = 'u32[144,128]{1,0:T(1,128)}', space=vmem, size = 0x12000, scoped, tag = 'internal scratch']
  %s0 = inlined_call_operand.hbm [shape: bf16[16,64], index: 0, kind: input, shape index: {}]
  %s1 = inlined_call_operand.hbm [shape: bf16[64,128], index: 1, kind: input, shape index: {}]
  %s2 = inlined_call_operand.vmem [shape: f32[1,128], index: 2, kind: input, shape index: {}]
  %s3 = inlined_call_operand.hbm [shape: f32[16,128], index: 3, kind: output, shape index: {}]
  %s4 = sld [smem:[#allocation0]]
  $region30: #{tpu_custom_call.1} parent=0
    _
  %s6 = ssub.s32 1, %s4
  %s7 = scalar_select 0, %s6, %s4
  $region1: #{tpu_custom_call.1} parent=0
    #allocation2 [shape = 'u8[4096]{0}', space=vmem, size = 0x1000, scoped, tag = 'input window, operand 0, single buffered']
    #allocation3 [shape = 's32[1]{0}', space=sflag, size = 0x4, scoped, tag = 'scoped memory for tpu_custom_call.1']
    #allocation4 [shape = 's32[1]{0}', space=sflag, size = 0x4, scoped, tag = 'scoped memory for tpu_custom_call.1']
    #allocation5 [shape = 'u8[16384]{0}', space=vmem, size = 0x4000, scoped, tag = 'input window, operand 1, single buffered']
    #allocation6 [shape = 's32[1]{0}', space=sflag, size = 0x4, scoped, tag = 'scoped memory for tpu_custom_call.1']
    #allocation7 [shape = 'u8[8192]{0}', space=vmem, size = 0x2000, scoped, tag = 'output window, operand 0, single buffered']
    %8 = vsyncpa [#allocation3], 0
    %9 = vsyncpa [#allocation6], 0
    %10 = vsyncpa [#allocation4], 0
    // Predicated region
    $region2: #{tpu_custom_call.1} parent=1 // pred_check
      _
    $region3: #{tpu_custom_call.1} parent=1 // pred_check_branch
      %12 = sbr.rel (0) target = $region5
    $region4: #{tpu_custom_call.1} parent=1 // pred_region
      %s14 = ssub.s32 128, 128
      %15 = vsyncadd [#allocation3], %s14
      %s16 = sshll.u32 [#allocation2], 4
      %s17 = int_to_ptr.vmem [resolvable:$true] %s16
      %22 = dma.hbm_to_vmem [thread:$0]  %s0, 128, %s17, [#allocation3], 64, 64, 4
    $region5: #{tpu_custom_call.1} parent=1 // pred_fallthru
      _
    // Predicated region
    $region6: #{tpu_custom_call.1} parent=1 // pred_check
      _
    $region7: #{tpu_custom_call.1} parent=1 // pred_check_branch
      %24 = sbr.rel (0) target = $region9
    $region8: #{tpu_custom_call.1} parent=1 // pred_region
      %s26 = ssub.s32 512, 512
      %27 = vsyncadd [#allocation6], %s26
      %s28 = sshll.u32 [#allocation5], 4
      %s29 = int_to_ptr.vmem [resolvable:$true] %s28
      %34 = dma.hbm_to_vmem [thread:$0]  %s1, 512, %s29, [#allocation6], 64, 64, 4
    $region9: #{tpu_custom_call.1} parent=1 // pred_fallthru
      _
    // Predicated region
    $region10: #{tpu_custom_call.1} parent=1 // pred_check
      _
    $region11: #{tpu_custom_call.1} parent=1 // pred_check_branch
      %36 = sbr.rel (0) target = $region13
    $region12: #{tpu_custom_call.1} parent=1 // pred_region
      _
    $region13: #{tpu_custom_call.1} parent=1 // pred_fallthru
      _
    // Predicated region
    $region14: #{tpu_custom_call.1} parent=1 // pred_check
      _
    $region15: #{tpu_custom_call.1} parent=1 // pred_check_branch
      %38 = sbr.rel (0) target = $region17
    $region16: #{tpu_custom_call.1} parent=1 // pred_region
      %39 = dma.done [#allocation3], 128
    $region17: #{tpu_custom_call.1} parent=1 // pred_fallthru
      _
    // Predicated region
    $region18: #{tpu_custom_call.1} parent=1 // pred_check
      _
    $region19: #{tpu_custom_call.1} parent=1 // pred_check_branch
      %41 = sbr.rel (0) target = $region21
    $region20: #{tpu_custom_call.1} parent=1 // pred_region
      %42 = dma.done [#allocation6], 512
    $region21: #{tpu_custom_call.1} parent=1 // pred_fallthru
      _
    %v44 = vld [vmem:[#allocation2] sm:$0xf]
    %v45 = vld [vmem:[#allocation2 + $0x4] sm:$0xf]
    %v46 = vld [vmem:[#allocation5] sm:$0xf]
    %v47 = vld [vmem:[#allocation5 + $0x4] sm:$0xf]
    %v48 = vld [vmem:[#allocation5 + $0x8] sm:$0xf]
    %v49 = vld [vmem:[#allocation5 + $0xc] sm:$0xf]
    %v50 = vld [vmem:[#allocation5 + $0x10] sm:$0xf]
    %v51 = vld [vmem:[#allocation5 + $0x14] sm:$0xf]
    %v52 = vld [vmem:[#allocation5 + $0x18] sm:$0xf]
    %v53 = vld [vmem:[#allocation5 + $0x1c] sm:$0xf]
    %v54 = vld [vmem:[%s2] sm:$0x1]
    %v56 = vlaneseq
    %v57 = vshrl.u32 %v56, 7
    %v58 = vsub.s32 0, %v57
    %v59 = vrot.slane %v54, %v58
    %v63 = vunpack.c.l.b16 %v44
    %v64 = vunpack.c.l.b16 %v45
    %v65 = vpack.c.b16 %v64, %v63
    %v74 = vunpack.c.l.b16 %v46
    %v75 = vunpack.c.l.b16 %v47
    %v76 = vunpack.c.l.b16 %v48
    %v77 = vunpack.c.l.b16 %v49
    %v78 = vunpack.c.l.b16 %v50
    %v79 = vunpack.c.l.b16 %v51
    %v80 = vunpack.c.l.b16 %v52
    %v81 = vunpack.c.l.b16 %v53
    %v82 = vpack.c.b16 %v75, %v74
    %v83 = vpack.c.b16 %v77, %v76
    %v84 = vpack.c.b16 %v79, %v78
    %v85 = vpack.c.b16 %v81, %v80
    %vm90 = vcmask 523264
    %v92 = vsel %vm90, %v65, 0
    %94 = vmatprep.subr.bf16.mxu0 0
    %95 = vmatpush1.bf16.msra.mxu0 0
    %96 = vmatprep.subr.bf16.mxu0 0
    %97 = vmatpush1.bf16.msra.mxu0 0
    %98 = vmatprep.subr.bf16.mxu0 0
    %99 = vmatpush1.bf16.msra.mxu0 0
    %100 = vmatprep.subr.bf16.mxu0 0
    %101 = vmatpush1.bf16.msra.mxu0 0
    %102 = vmatprep.subr.bf16.mxu0 0
    %103 = vmatpush1.bf16.msra.mxu0 %v85
    %104 = vmatprep.subr.bf16.mxu0 0
    %105 = vmatpush1.bf16.msra.mxu0 %v84
    %106 = vmatprep.subr.bf16.mxu0 0
    %107 = vmatpush1.bf16.msra.mxu0 %v83
    %108 = vmatprep.subr.bf16.mxu0 0
    %109 = vmatpush1.bf16.msra.mxu0 %v82
    %110 = vmatprep.subr.bf16.mxu0 0
    %111 = vmatpush2.bf16.msra.mxu0 0
    %112 = vmatprep.subr.bf16.mxu0 0
    %113 = vmatpush2.bf16.msra.mxu0 0
    %114 = vmatprep.subr.bf16.mxu0 0
    %115 = vmatpush2.bf16.msra.mxu0 0
    %116 = vmatprep.subr.bf16.mxu0 0
    %117 = vmatpush2.bf16.msra.mxu0 0
    %118 = vmatprep.subr.bf16.mxu0 0
    %119 = vmatpush2.bf16.msra.mxu0 0
    %120 = vmatprep.subr.bf16.mxu0 0
    %121 = vmatpush2.bf16.msra.mxu0 0
    %122 = vmatprep.subr.bf16.mxu0 0
    %123 = vmatpush2.bf16.msra.mxu0 0
    %124 = vmatprep.subr.bf16.mxu0 0
    %125 = vmatpush2.bf16.msra.mxu0 0
    %126 = vmatprep.mubr.bf16.mxu0 0
    %127 = vmatmul.mubr.bf16.gmra.mxu0 %v92
    %v128 = vpop.f32.mrf.mxu0
    %v129 = vadd.f32 %v59, %v128
    %v130 = vpop.f32.mrf.mxu0
    %v131 = vpop.f32.mrf.mxu0
    %v132 = vadd.f32 %v59, %v131
    %v133 = vpop.f32.mrf.mxu0
    %134 = vdwg.mxu0
    %v135 = vmax.f32 %v129, 0.0
    %v136 = vmax.f32 %v132, 0.0
    %137 = vst [vmem:[#allocation7] sm:$0xff] %v135
    %138 = vst [vmem:[#allocation7 + $0x8] sm:$0xff] %v136
    // Predicated region
    $region22: #{tpu_custom_call.1} parent=1 // pred_check
      _
    $region23: #{tpu_custom_call.1} parent=1 // pred_check_branch
      %140 = sbr.rel (0) target = $region25
    $region24: #{tpu_custom_call.1} parent=1 // pred_region
      %s142 = ssub.s32 256, 256
      %143 = vsyncadd [#allocation4], %s142
      %s144 = sshll.u32 [#allocation7], 4
      %s145 = int_to_ptr.vmem [resolvable:$true] %s144
      %150 = dma.vmem_to_hbm [thread:$0]  %s145, 256, %s3, [#allocation4], 128, 128, 8
    $region25: #{tpu_custom_call.1} parent=1 // pred_fallthru
      _
    // Predicated region
    $region26: #{tpu_custom_call.1} parent=1 // pred_check
      _
    $region27: #{tpu_custom_call.1} parent=1 // pred_check_branch
      %152 = sbr.rel (0) target = $region29
    $region28: #{tpu_custom_call.1} parent=1 // pred_region
      %153 = dma.done [#allocation4], 256
    $region29: #{tpu_custom_call.1} parent=1 // pred_fallthru
      _
    %154 = vsyncpa [#allocation3], 1
    %155 = vsyncpa [#allocation6], 1
    %156 = vsyncpa [#allocation4], 1

</llo_original>
